<compile_context>
chip_gen: v5e
topology: v5e:2x2
jax: 0.10.0
libtpu: 0.0.40
codegen_flags: <defaults>
</compile_context>

<pallas_src>
import functools

import jax
import jax.numpy as jnp
from jax.experimental import pallas as pl
from jax.experimental.pallas import tpu as pltpu


def _rmsnorm_kernel(x_ref, w_ref, o_ref, *, eps: float, inv_h: float):
    # x_ref: (tm, H) input tile, original dtype (e.g. bf16)
    # w_ref: (1, H) weight row, original dtype (resident across grid steps)
    # o_ref: (tm, H) output tile, same dtype as input
    #
    # Pass 1: fp32 variance = mean(x^2) over the hidden axis (matches torch).
    # sum * (1/H) with a compile-time constant avoids a per-row divide; the
    # cross-lane reduce lands on the XLU and rsqrt on the EUP.
    x_f32 = x_ref[...].astype(jnp.float32)
    variance = jnp.sum(x_f32 * x_f32, axis=-1, keepdims=True) * inv_h
    inv_rms = jax.lax.rsqrt(variance + eps)
    # Pass 2: re-read and re-cast the tile for the scaling step instead of
    # keeping the fp32 copy of the whole tile live across the reduce.  A bf16
    # reload + VPU cast is cheaper than spilling/reloading a tm*H*4 f32 temp
    # through VMEM (matters on v7x where the kernel can flip to ld/st-bound).
    x_scale = x_ref[...].astype(jnp.float32)
    out_f32 = w_ref[...].astype(jnp.float32) * (x_scale * inv_rms)
    o_ref[...] = out_f32.astype(o_ref.dtype)


def _chip_budget():
    """Return (tile_budget_bytes, vmem_limit_bytes, is_v7x) for this chip."""
    try:
        vmem_cap = int(pltpu.get_tpu_info().vmem_capacity_bytes)
    except Exception:  # interpret mode / older runtimes: assume 128 MiB class
        vmem_cap = 128 * 1024 * 1024
    # v7x: 64 MiB VMEM per TensorCore, 2 TCs per chip share the 'parallel'
    # grid axis.  v5e/v6e: 128 MiB VMEM, 1 TC per chip.
    is_v7x = vmem_cap <= 96 * 1024 * 1024
    if is_v7x:
        tile_budget = 14 * 1024 * 1024          # conservative: OOM-free on 64 MiB
        vmem_limit = 36 * 1024 * 1024           # well under 64 MiB physical
    else:
        tile_budget = 24 * 1024 * 1024
        vmem_limit = 64 * 1024 * 1024           # well under 128 MiB physical
    return tile_budget, vmem_limit, is_v7x


def _round_up(x: int, m: int) -> int:
    return ((x + m - 1) // m) * m


def _pick_row_tile(n_rows: int, hidden: int, dtype, tile_budget: int, is_v7x: bool) -> int:
    """Pick the largest row tile that fits the per-chip VMEM tile budget."""
    dsize = jnp.dtype(dtype).itemsize
    # Sublane packing: 8 rows per vreg at 32-bit, 16 at 16-bit, 32 at 8-bit.
    sub = max(8, 32 // dsize)
    # Bytes per row: in + out tiles, double-buffered (4x input-dtype), plus
    # ~3 fp32-sized live temporaries inside the kernel body (x_f32, the
    # squared/normed product, out_f32).
    per_row = hidden * (4 * dsize + 3 * 4)
    tm = tile_budget // per_row
    tm = max(sub, min(1024, (tm // sub) * sub))
    # Never make the block taller than the (sublane-rounded) row count.
    tm = min(tm, _round_up(n_rows, sub))

    if is_v7x and n_rows > sub:
        # Two TensorCores share the 'parallel' grid axis: force an EVEN grid
        # so the work splits 1:1 (an odd small grid leaves one core idle for
        # up to a full tile).  Pick the grid first, then derive the tile.
        gm = pl.cdiv(n_rows, tm)
        if gm % 2 != 0:
            gm += 1
        tm_balanced = _round_up(pl.cdiv(n_rows, gm), sub)
        tm = max(sub, min(tm, tm_balanced))
    # v5e / v6e: single TensorCore -> grid is a serial loop; keep tm as large
    # as the budget allows (no halving), extra grid steps are pure overhead.
    return tm


def rms_norm(x: jax.Array, weight: jax.Array, eps: float, *, tm: int | None = None) -> jax.Array:
    """RMSNorm over the last axis of x.  x: (..., H), weight: (H,)."""
    orig_shape = x.shape
    H = orig_shape[-1]
    x2d = x.reshape(-1, H)
    n_rows = x2d.shape[0]

    tile_budget, vmem_limit, is_v7x = _chip_budget()
    if tm is None:
        tm = _pick_row_tile(n_rows, H, x.dtype, tile_budget, is_v7x)

    # No padding / slicing: grid covers the un-padded array; the trailing
    # partial tile (if any) gets masked writes, and its OOB reads only feed
    # rows whose results are discarded (rows are fully independent).
    grid_m = pl.cdiv(n_rows, tm)

    w2d = weight.reshape(1, H)

    kernel = functools.partial(_rmsnorm_kernel, eps=eps, inv_h=1.0 / H)

    out2d = pl.pallas_call(
        kernel,
        out_shape=jax.ShapeDtypeStruct((n_rows, H), x.dtype),
        grid_spec=pltpu.PrefetchScalarGridSpec(
            num_scalar_prefetch=0,
            grid=(grid_m,),
            in_specs=[
                pl.BlockSpec((tm, H), lambda i: (i, 0)),   # input row tile
                pl.BlockSpec((1, H), lambda i: (0, 0)),    # weight (resident)
            ],
            out_specs=pl.BlockSpec((tm, H), lambda i: (i, 0)),
        ),
        compiler_params=pltpu.CompilerParams(
            dimension_semantics=("parallel",),
            vmem_limit_bytes=vmem_limit,
        ),
    )(x2d, w2d)

    return out2d.reshape(orig_shape)


# TODO(synk): the GLMEmbedding / GLMBlock branches of GLMSequentialWrapper
# (token-embedding gather, full transformer block, gradient-checkpoint
# dispatch) are Python control flow over other modules and are not translated
# here; only the GLMLayerNorm (RMSNorm) tensor math has a Pallas kernel.


def _ref_rms_norm(x, weight, eps):
    x_f32 = x.astype(jnp.float32)
    var = jnp.mean(x_f32 * x_f32, axis=-1, keepdims=True)
    return (weight.astype(jnp.float32) * (x_f32 * jax.lax.rsqrt(var + eps))).astype(x.dtype)


if __name__ == "__main__":
    key = jax.random.PRNGKey(0)
    k_x, k_w = jax.random.split(key)

    batch, seq, hidden = 2, 8, 128
    eps = 1e-5

    # Deterministic synthetic parameter + input (bf16, as is typical for ChatGLM).
    x = jax.random.normal(k_x, (batch, seq, hidden), dtype=jnp.float32).astype(jnp.bfloat16)
    weight = (1.0 + 0.01 * jax.random.normal(k_w, (hidden,), dtype=jnp.float32)).astype(
        jnp.bfloat16
    )

    out = jax.block_until_ready(rms_norm(x, weight, eps))
    ref = _ref_rms_norm(x, weight, eps)

    assert out.shape == x.shape and out.dtype == x.dtype
    assert jnp.allclose(out.astype(jnp.float32), ref.astype(jnp.float32), atol=1e-2, rtol=1e-2)

    # Non-divisible token count: exercises the masked edge-tile path (no pad).
    x_big = jax.random.normal(k_x, (3, 37, hidden), dtype=jnp.float32).astype(jnp.bfloat16)
    out_big = jax.block_until_ready(rms_norm(x_big, weight, eps))
    ref_big = _ref_rms_norm(x_big, weight, eps)
    assert jnp.allclose(
        out_big.astype(jnp.float32), ref_big.astype(jnp.float32), atol=1e-2, rtol=1e-2
    )

    print("KERNEL_OK")
</pallas_src>

<mosaic_0001>
module attributes {stable_mosaic.version = 11 : i64} {
  func.func @_rmsnorm_kernel(%arg0: i32, %arg1: memref<16x128xbf16, #tpu.memory_space<vmem>>, %arg2: memref<1x128xbf16, #tpu.memory_space<vmem>>, %arg3: memref<16x128xbf16, #tpu.memory_space<vmem>>) attributes {dimension_semantics = [#tpu.dimension_semantics<parallel>], iteration_bounds = array<i64: 1>, scalar_prefetch = 0 : i64, scratch_operands = 0 : i64, tpu.core_type = #tpu.core_type<tc>, window_params = [{transform_indices = @transform_0, window_bounds = array<i64: 16, 128>}, {pipeline_mode = #tpu.pipeline_mode<synchronous>, transform_indices = @transform_1, window_bounds = array<i64: 1, 128>}, {transform_indices = @transform_2, window_bounds = array<i64: 16, 128>}]} {
    %c0 = arith.constant 0 : index
    %c0_0 = arith.constant 0 : index
    %0 = vector.load %arg1[%c0, %c0_0] : memref<16x128xbf16, #tpu.memory_space<vmem>>, vector<16x128xbf16>
    %1 = arith.extf %0 : vector<16x128xbf16> to vector<16x128xf32>
    %2 = arith.mulf %1, %1 : vector<16x128xf32>
    %cst = arith.constant dense<0.000000e+00> : vector<16xf32>
    %3 = vector.multi_reduction <add>, %2, %cst [1] : vector<16x128xf32> to vector<16xf32>
    %4 = vector.shape_cast %3 : vector<16xf32> to vector<16x1xf32>
    %cst_1 = arith.constant 7.812500e-03 : f32
    %5 = vector.broadcast %cst_1 : f32 to vector<16x1xf32>
    %6 = arith.mulf %4, %5 : vector<16x1xf32>
    %cst_2 = arith.constant 9.99999974E-6 : f32
    %7 = vector.broadcast %cst_2 : f32 to vector<16x1xf32>
    %8 = arith.addf %6, %7 : vector<16x1xf32>
    %9 = math.rsqrt %8 : vector<16x1xf32>
    %c0_3 = arith.constant 0 : index
    %c0_4 = arith.constant 0 : index
    %10 = vector.load %arg1[%c0_3, %c0_4] : memref<16x128xbf16, #tpu.memory_space<vmem>>, vector<16x128xbf16>
    %11 = arith.extf %10 : vector<16x128xbf16> to vector<16x128xf32>
    %c0_5 = arith.constant 0 : index
    %c0_6 = arith.constant 0 : index
    %12 = vector.load %arg2[%c0_5, %c0_6] : memref<1x128xbf16, #tpu.memory_space<vmem>>, vector<1x128xbf16>
    %13 = arith.extf %12 : vector<1x128xbf16> to vector<1x128xf32>
    %14 = vector.broadcast %9 : vector<16x1xf32> to vector<16x128xf32>
    %15 = arith.mulf %11, %14 : vector<16x128xf32>
    %16 = vector.broadcast %13 : vector<1x128xf32> to vector<16x128xf32>
    %17 = arith.mulf %16, %15 : vector<16x128xf32>
    %18 = arith.truncf %17 : vector<16x128xf32> to vector<16x128xbf16>
    %c0_7 = arith.constant 0 : index
    %c0_8 = arith.constant 0 : index
    %19 = vector.load %arg3[%c0_7, %c0_8] : memref<16x128xbf16, #tpu.memory_space<vmem>>, vector<16x128xbf16>
    tpu.vector_store %arg3[%c0_7, %c0_8], %18 {strides = array<i32>} : memref<16x128xbf16, #tpu.memory_space<vmem>>, vector<16x128xbf16>,
    return
  }
  func.func @transform_0(%arg0: i32) -> (i32, i32) {
    %c0_i32 = arith.constant 0 : i32
    %c0_i32_0 = arith.constant 0 : i32
    return %arg0, %c0_i32 : i32, i32
  }
  func.func @transform_1(%arg0: i32) -> (i32, i32) {
    %c0_i32 = arith.constant 0 : i32
    %c0_i32_0 = arith.constant 0 : i32
    %c0_i32_1 = arith.constant 0 : i32
    return %c0_i32, %c0_i32_0 : i32, i32
  }
  func.func @transform_2(%arg0: i32) -> (i32, i32) {
    %c0_i32 = arith.constant 0 : i32
    %c0_i32_0 = arith.constant 0 : i32
    return %arg0, %c0_i32 : i32, i32
  }
}

</mosaic_0001>

<llo_original>
// kernel: tpu_custom_call.1
$region0: #{tpu_custom_call.1}
  #allocation0 [shape = 'u32[]', space=smem, size = 0x4, offset = 0x4, fixed_abs, tag = 'smem constant byte address 0x4 - core index']
  #allocation1 [shape = 'u32[72,128]{1,0:T(1,128)}', space=vmem, size = 0x9000, scoped, tag = 'internal scratch']
  %s0 = inlined_call_operand.hbm [shape: bf16[16,128], index: 0, kind: input, shape index: {}]
  %s1 = inlined_call_operand.hbm [shape: bf16[1,128], index: 1, kind: input, shape index: {}]
  %s2 = inlined_call_operand.hbm [shape: bf16[16,128], index: 2, kind: output, shape index: {}]
  %s3 = sld [smem:[#allocation0]]
  $region26: #{tpu_custom_call.1} parent=0
    _
  %s5 = ssub.s32 1, %s3
  %s6 = scalar_select 0, %s5, %s3
  $region1: #{tpu_custom_call.1} parent=0
    #allocation2 [shape = 'u8[4096]{0}', space=vmem, size = 0x1000, scoped, tag = 'input window, operand 0, single buffered']
    #allocation3 [shape = 's32[1]{0}', space=sflag, size = 0x4, scoped, tag = 'scoped memory for tpu_custom_call.1']
    #allocation4 [shape = 's32[1]{0}', space=sflag, size = 0x4, scoped, tag = 'scoped memory for tpu_custom_call.1']
    #allocation5 [shape = 'u8[512]{0}', space=vmem, size = 0x400, scoped, tag = 'input window, operand 1, single buffered']
    #allocation6 [shape = 's32[1]{0}', space=sflag, size = 0x4, scoped, tag = 'scoped memory for tpu_custom_call.1']
    #allocation7 [shape = 'u8[4096]{0}', space=vmem, size = 0x1000, scoped, tag = 'output window, operand 0, single buffered']
    %7 = vsyncpa [#allocation3], 0
    %8 = vsyncpa [#allocation6], 0
    %9 = vsyncpa [#allocation4], 0
    // Predicated region
    $region2: #{tpu_custom_call.1} parent=1 // pred_check
      _
    $region3: #{tpu_custom_call.1} parent=1 // pred_check_branch
      %11 = sbr.rel (0) target = $region5
    $region4: #{tpu_custom_call.1} parent=1 // pred_region
      %13 = vsyncadd [#allocation3], 0
      %s14 = sshll.u32 %s0, 4
      %s15 = int_to_ptr.hbm [resolvable:$true] %s14
      %s16 = sshll.u32 [#allocation2], 4
      %s17 = int_to_ptr.vmem [resolvable:$true] %s16
      %22 = dma.hbm_to_vmem [thread:$0]  %s15, 128, %s17, [#allocation3], 64, 64, 4
    $region5: #{tpu_custom_call.1} parent=1 // pred_fallthru
      _
    // Predicated region
    $region6: #{tpu_custom_call.1} parent=1 // pred_check
      _
    $region7: #{tpu_custom_call.1} parent=1 // pred_check_branch
      %24 = sbr.rel (0) target = $region9
    $region8: #{tpu_custom_call.1} parent=1 // pred_region
      %26 = vsyncadd [#allocation6], 0
      %s28 = sshll.u32 %s1, 4
      %s29 = int_to_ptr.hbm [resolvable:$true] %s28
      %s30 = sshll.u32 [#allocation5], 4
      %s31 = int_to_ptr.vmem [resolvable:$true] %s30
      %33 = dma.hbm_to_vmem [thread:$0]  %s29, 16, %s31, [#allocation6]
    $region9: #{tpu_custom_call.1} parent=1 // pred_fallthru
      _
    // Predicated region
    $region10: #{tpu_custom_call.1} parent=1 // pred_check
      _
    $region11: #{tpu_custom_call.1} parent=1 // pred_check_branch
      %35 = sbr.rel (0) target = $region13
    $region12: #{tpu_custom_call.1} parent=1 // pred_region
      %37 = dma.done [#allocation3], 128
    $region13: #{tpu_custom_call.1} parent=1 // pred_fallthru
      _
    // Predicated region
    $region14: #{tpu_custom_call.1} parent=1 // pred_check
      _
    $region15: #{tpu_custom_call.1} parent=1 // pred_check_branch
      %39 = sbr.rel (0) target = $region17
    $region16: #{tpu_custom_call.1} parent=1 // pred_region
      %41 = dma.done [#allocation6], 16
    $region17: #{tpu_custom_call.1} parent=1 // pred_fallthru
      _
    %v42 = vld [vmem:[#allocation2] sm:$0xf]
    %v43 = vld [vmem:[#allocation2 + $0x4] sm:$0xf]
    %v44 = vunpack.c.l.bf16 %v42
    %v45 = vunpack.c.l.bf16 %v43
    %v46 = vmul.f32 %v44, %v44
    %v47 = vmul.f32 %v45, %v45
    %48 = vadd.xlane.f32.xlu0 %v46
    %v49 = vpop.xlane.xlu0 %48
    %50 = vadd.xlane.f32.xlu0 %v47
    %v51 = vpop.xlane.xlu0 %50
    %v52 = vmul.f32 %v49, 0.0078125
    %v53 = vmul.f32 %v51, 0.0078125
    %v54 = vadd.f32 %v52, 1e-05
    %v55 = vadd.f32 %v53, 1e-05
    %v56 = vrsqrt.pop %v54
    %v57 = vmul.f32 %v56, %v54
    %v58 = vmul.f32 %v57, %v56
    %v59 = vmul.f32 0.5, %v58
    %v60 = vsub.f32 1.5, %v59
    %v61 = vmul.f32 %v56, %v60
    %vm62 = vweird.f32 %v54
    %vm63 = vweird.f32 %v56
    %vm64 = vmor %vm62, %vm63
    %v65 = vsel %vm64, %v56, %v61
    %v66 = vrsqrt.pop %v55
    %v67 = vmul.f32 %v66, %v55
    %v68 = vmul.f32 %v67, %v66
    %v69 = vmul.f32 0.5, %v68
    %v70 = vsub.f32 1.5, %v69
    %v71 = vmul.f32 %v66, %v70
    %vm72 = vweird.f32 %v55
    %vm73 = vweird.f32 %v66
    %vm74 = vmor %vm72, %vm73
    %v75 = vsel %vm74, %v66, %v71
    %v76 = vld [vmem:[#allocation5] sm:$0x1]
    %v77 = vunpack.c.l.bf16 %v76
    %v78 = vmul.f32 %v44, %v65
    %v79 = vmul.f32 %v45, %v75
    %v80 = vperm.slane %v77, 0
    %v81 = vmul.f32 %v80, %v78
    %v82 = vmul.f32 %v80, %v79
    %v83 = vpack.c.bf16 %v81, %v81
    %v84 = vpack.c.bf16 %v82, %v82
    %85 = vst [vmem:[#allocation7] sm:$0xf] %v83
    %86 = vst [vmem:[#allocation7 + $0x4] sm:$0xf] %v84
    // Predicated region
    $region18: #{tpu_custom_call.1} parent=1 // pred_check
      _
    $region19: #{tpu_custom_call.1} parent=1 // pred_check_branch
      %88 = sbr.rel (0) target = $region21
    $region20: #{tpu_custom_call.1} parent=1 // pred_region
      %90 = vsyncadd [#allocation4], 0
      %s91 = sshll.u32 [#allocation7], 4
      %s92 = int_to_ptr.vmem [resolvable:$true] %s91
      %s93 = sshll.u32 %s2, 4
      %s94 = int_to_ptr.hbm [resolvable:$true] %s93
      %99 = dma.vmem_to_hbm [thread:$0]  %s92, 128, %s94, [#allocation4], 64, 64, 4
    $region21: #{tpu_custom_call.1} parent=1 // pred_fallthru
      _
    // Predicated region
    $region22: #{tpu_custom_call.1} parent=1 // pred_check
      _
    $region23: #{tpu_custom_call.1} parent=1 // pred_check_branch
      %101 = sbr.rel (0) target = $region25
    $region24: #{tpu_custom_call.1} parent=1 // pred_region
      %103 = dma.done [#allocation4], 128
    $region25: #{tpu_custom_call.1} parent=1 // pred_fallthru
      _
    %104 = vsyncpa [#allocation3], 1
    %105 = vsyncpa [#allocation6], 1
    %106 = vsyncpa [#allocation4], 1

</llo_original>
